<compile_context>
chip_gen: v7x
topology: tpu7x:2x2x1
jax: 0.10.0
libtpu: 0.0.40
codegen_flags: <defaults>
</compile_context>

<pallas_src>
import functools

import jax
import jax.numpy as jnp
from jax.experimental import pallas as pl
from jax.experimental.pallas import tpu as pltpu

_LANE = 128


def _round_up(v, m):
    return (v + m - 1) // m * m


def _round_down(v, m):
    return v // m * m


def _cdiv(a, b):
    return (a + b - 1) // b


def _physical_vmem_bytes():
    try:
        return int(pltpu.get_tpu_info().vmem_capacity_bytes)
    except Exception:
        return 64 << 20  # conservative fallback: v7x per-TensorCore VMEM


# --------------------------------------------------------------------------- #
# Kernels
# --------------------------------------------------------------------------- #
def _fovea_body(s_f32, x_f32, o_ref):
    # Numerically stable softmax over the last (lane) axis, times original x.
    m = jnp.max(s_f32, axis=-1, keepdims=True)
    p = jnp.exp(s_f32 - m)
    denom = jnp.sum(p, axis=-1, keepdims=True)
    inv = pl.reciprocal(denom)            # exact; only (rows, 1) values
    o_ref[...] = (p * inv * x_f32).astype(o_ref.dtype)


def _fovea_kernel_plain(x_ref, o_ref):
    x = x_ref[...].astype(jnp.float32)
    _fovea_body(x, x, o_ref)


def _fovea_kernel_smooth(smooth_ref, x_ref, o_ref):
    x = x_ref[...].astype(jnp.float32)
    _fovea_body(x * smooth_ref[0, 0], x, o_ref)


# --------------------------------------------------------------------------- #
# Wrapper
# --------------------------------------------------------------------------- #
@functools.partial(jax.jit, static_argnames=("smooth",))
def _fovea_impl(x, smooth_scale, smooth):
    b, c, h, w = x.shape
    rows = b * c
    hw = h * w

    itemsize = jnp.dtype(x.dtype).itemsize
    sublane = 8 if itemsize >= 4 else (16 if itemsize == 2 else 32)
    hw_vmem = _round_up(hw, _LANE)  # lane-padded width of a VMEM tile

    # ---- VMEM-aware row-tile selection ------------------------------------
    # Per row of a tile we keep: 2 pipeline buffers for the input block + 2 for
    # the output block (I/O dtype) + ~3 f32 intermediates (x_f32, s, p).
    per_row_vmem = hw_vmem * (4 * itemsize + 3 * 4)
    phys_vmem = _physical_vmem_bytes()
    tile_budget = min(phys_vmem // 2, 48 << 20)

    row_tile = max(sublane, _round_down(tile_budget // per_row_vmem, sublane))
    full_rows_cap = _round_down(rows, sublane)
    if full_rows_cap == 0:
        # Fewer rows than one sublane group: single block == full rows dim.
        row_tile = rows
    else:
        row_tile = min(row_tile, full_rows_cap)
        # Keep >= ~8 grid steps (pipeline warm, both v7x TensorCores busy) as
        # long as each step still streams >= ~1 MiB of I/O.
        eight_step_rows = max(sublane, _round_up(_cdiv(rows, 8), sublane))
        if eight_step_rows * hw_vmem * itemsize >= (1 << 20):
            row_tile = min(row_tile, eight_step_rows)

    grid = (_cdiv(rows, row_tile),)

    resident = row_tile * per_row_vmem
    vmem_limit = max(resident + (16 << 20), 32 << 20)
    vmem_limit = min(vmem_limit, max(32 << 20, phys_vmem - (16 << 20)))

    x2d = x.reshape(rows, hw)
    # Last block dim == full hw (no lane padding ever materialized in HBM);
    # ragged last row-block: OOB rows are never written back.
    blk = pl.BlockSpec((row_tile, hw), lambda i: (i, 0))

    if smooth:
        kernel = _fovea_kernel_smooth
        in_specs = [pl.BlockSpec(memory_space=pltpu.MemorySpace.SMEM), blk]
        args = (smooth_scale.astype(jnp.float32), x2d)
    else:
        kernel = _fovea_kernel_plain
        in_specs = [blk]
        args = (x2d,)

    out2d = pl.pallas_call(
        kernel,
        out_shape=jax.ShapeDtypeStruct((rows, hw), x.dtype),
        grid=grid,
        in_specs=in_specs,
        out_specs=blk,
        compiler_params=pltpu.CompilerParams(
            dimension_semantics=("parallel",),
            vmem_limit_bytes=int(vmem_limit),
        ),
    )(*args)

    return out2d.reshape(b, c, h, w)


def fovea_forward(x, smooth_scale=None):
    """Fovea.forward.  smooth_scale=None => smooth=False; else the learned scalar."""
    if smooth_scale is None:
        dummy = jnp.zeros((1, 1), jnp.float32)
        return _fovea_impl(x, dummy, False)
    scale = jnp.asarray(smooth_scale, jnp.float32).reshape(1, 1)
    return _fovea_impl(x, scale, True)


def fovea_reference(x, smooth_scale=None):
    b, c, h, w = x.shape
    xf = x.reshape(b, c, h * w).astype(jnp.float32)
    if smooth_scale is None:
        s = xf
    else:
        s = xf * jnp.asarray(smooth_scale, jnp.float32).reshape(())
    mask = jax.nn.softmax(s, axis=-1)
    return (mask * xf).astype(x.dtype).reshape(b, c, h, w)


# --------------------------------------------------------------------------- #
# Self-test
# --------------------------------------------------------------------------- #
if __name__ == "__main__":
    key = jax.random.PRNGKey(0)
    b, c, h, w = 2, 4, 16, 16
    x = jax.random.normal(key, (b, c, h, w), dtype=jnp.float32)

    # Parameter init mirroring the module: smooth = torch.zeros(1) + 10.0
    smooth_param = jnp.full((1, 1), 10.0, dtype=jnp.float32)

    # 1) f32, lane-aligned spatial, smooth=True.
    out = fovea_forward(x, smooth_param)
    jax.block_until_ready(out)
    ref = fovea_reference(x, smooth_param)
    assert out.shape == (b, c, h, w)
    assert jnp.allclose(out, ref, atol=1e-6, rtol=1e-4), "f32 smooth=True mismatch"

    # 2) smooth=False path (scale multiply specialized away at trace time).
    out_plain = fovea_forward(x)
    jax.block_until_ready(out_plain)
    ref_plain = fovea_reference(x, None)
    assert jnp.allclose(out_plain, ref_plain, atol=1e-6, rtol=1e-4), "smooth=False mismatch"

    # 3) Non-128-multiple spatial (18x18 = 324): no HBM pad/slice, full-hw block.
    x_odd = jax.random.normal(jax.random.PRNGKey(1), (2, 4, 18, 18), dtype=jnp.float32)
    out_odd = fovea_forward(x_odd, smooth_param)
    jax.block_until_ready(out_odd)
    ref_odd = fovea_reference(x_odd, smooth_param)
    assert jnp.allclose(out_odd, ref_odd, atol=1e-6, rtol=1e-4), "ragged-hw mismatch"

    # 4) bf16 I/O (halved HBM traffic), f32 math inside the kernel.
    x_bf16 = jax.random.normal(jax.random.PRNGKey(2), (b, c, h, w)).astype(jnp.bfloat16)
    out_bf16 = fovea_forward(x_bf16, smooth_param)
    jax.block_until_ready(out_bf16)
    ref_bf16 = fovea_reference(x_bf16, smooth_param)
    assert out_bf16.dtype == jnp.bfloat16
    assert jnp.allclose(out_bf16.astype(jnp.float32), ref_bf16.astype(jnp.float32),
                        atol=1e-2, rtol=2e-2), "bf16 mismatch"

    print("KERNEL_OK")
</pallas_src>

<mosaic_0001>
module attributes {stable_mosaic.version = 11 : i64} {
  func.func @_fovea_kernel_smooth(%arg0: i32, %arg1: memref<1x1xf32, #tpu.memory_space<smem>>, %arg2: memref<8x256xf32, #tpu.memory_space<vmem>>, %arg3: memref<8x256xf32, #tpu.memory_space<vmem>>) attributes {dimension_semantics = [#tpu.dimension_semantics<parallel>], iteration_bounds = array<i64: 1>, scalar_prefetch = 0 : i64, scratch_operands = 0 : i64, tpu.core_type = #tpu.core_type<tc>, window_params = [{transform_indices = @transform_0, window_bounds = array<i64: 1, 1>}, {transform_indices = @transform_1, window_bounds = array<i64: 8, 256>}, {transform_indices = @transform_2, window_bounds = array<i64: 8, 256>}]} {
    %c0 = arith.constant 0 : index
    %c0_0 = arith.constant 0 : index
    %0 = vector.load %arg2[%c0, %c0_0] : memref<8x256xf32, #tpu.memory_space<vmem>>, vector<8x256xf32>
    %c0_1 = arith.constant 0 : index
    %c0_2 = arith.constant 0 : index
    %1 = memref.load %arg1[%c0_1, %c0_2] : memref<1x1xf32, #tpu.memory_space<smem>>
    %2 = vector.broadcast %1 : f32 to vector<8x256xf32>
    %3 = arith.mulf %0, %2 : vector<8x256xf32>
    %cst = arith.constant dense<0xFF800000> : vector<8xf32>
    %4 = vector.multi_reduction <maximumf>, %3, %cst [1] : vector<8x256xf32> to vector<8xf32>
    %5 = vector.shape_cast %4 : vector<8xf32> to vector<8x1xf32>
    %6 = vector.broadcast %5 : vector<8x1xf32> to vector<8x256xf32>
    %7 = arith.subf %3, %6 : vector<8x256xf32>
    %8 = math.exp %7 : vector<8x256xf32>
    %cst_3 = arith.constant dense<0.000000e+00> : vector<8xf32>
    %9 = vector.multi_reduction <add>, %8, %cst_3 [1] : vector<8x256xf32> to vector<8xf32>
    %10 = vector.shape_cast %9 : vector<8xf32> to vector<8x1xf32>
    %11 = tpu.reciprocal %10 : vector<8x1xf32> -> vector<8x1xf32>
    %12 = vector.broadcast %11 : vector<8x1xf32> to vector<8x256xf32>
    %13 = arith.mulf %8, %12 : vector<8x256xf32>
    %14 = arith.mulf %13, %0 : vector<8x256xf32>
    %c0_4 = arith.constant 0 : index
    %c0_5 = arith.constant 0 : index
    %15 = vector.load %arg3[%c0_4, %c0_5] : memref<8x256xf32, #tpu.memory_space<vmem>>, vector<8x256xf32>
    tpu.vector_store %arg3[%c0_4, %c0_5], %14 {strides = array<i32>} : memref<8x256xf32, #tpu.memory_space<vmem>>, vector<8x256xf32>,
    return
  }
  func.func @transform_0(%arg0: i32) -> (i32, i32) {
    %c0_i32 = arith.constant 0 : i32
    %c0_i32_0 = arith.constant 0 : i32
    %c0_i32_1 = arith.constant 0 : i32
    return %c0_i32, %c0_i32_0 : i32, i32
  }
  func.func @transform_1(%arg0: i32) -> (i32, i32) {
    %c0_i32 = arith.constant 0 : i32
    %c0_i32_0 = arith.constant 0 : i32
    return %arg0, %c0_i32 : i32, i32
  }
  func.func @transform_2(%arg0: i32) -> (i32, i32) {
    %c0_i32 = arith.constant 0 : i32
    %c0_i32_0 = arith.constant 0 : i32
    return %arg0, %c0_i32 : i32, i32
  }
}

</mosaic_0001>

<llo_original>
// kernel: _fovea_impl.1
$region0: #{_fovea_impl.1}
  #allocation0 [shape = 'u32[]', space=smem, size = 0x4, offset = 0x4, fixed_abs, tag = 'smem constant byte address 0x4 - core index']
  #allocation1 [shape = 'u32[144,128]{1,0:T(1,128)}', space=vmem, size = 0x12000, scoped, tag = 'internal scratch']
  #allocation2 [shape = 'f32[1,1]{1,0:T(1,128)S(6)}', space=smem, size = 0x200, scoped, tag = 'scoped memory for _fovea_impl.1']
  %s0 = inlined_call_operand.<no memory space> [shape: f32[1,1], index: 0, kind: input, shape index: {}]
  %s1 = inlined_call_operand.vmem [shape: f32[8,256], index: 1, kind: input, shape index: {}]
  %s2 = inlined_call_operand.vmem [shape: f32[8,256], index: 2, kind: output, shape index: {}]
  %s3 = sld [smem:[#allocation0]]
  $region18: #{_fovea_impl.1} parent=0
    _
  %s5 = ssub.s32 1, %s3
  %s6 = scalar_select 0, %s5, %s3
  %7 = sst [smem:[#allocation2]] %s0
  // Predicated region
  $region2: #{_fovea_impl.1} parent=0 // pred_check
    _
  $region3: #{_fovea_impl.1} parent=0 // pred_check_branch
    %9 = sbr.rel (0) target = $region5
  $region4: #{_fovea_impl.1} parent=0 // pred_region
    _
  $region5: #{_fovea_impl.1} parent=0 // pred_fallthru
    _
  // Predicated region
  $region6: #{_fovea_impl.1} parent=0 // pred_check
    _
  $region7: #{_fovea_impl.1} parent=0 // pred_check_branch
    %11 = sbr.rel (0) target = $region9
  $region8: #{_fovea_impl.1} parent=0 // pred_region
    _
  $region9: #{_fovea_impl.1} parent=0 // pred_fallthru
    _
  %v12 = vld [vmem:[%s1] sm:$0xff]
  %v13 = vld [vmem:[%s1 + $0x8] sm:$0xff]
  %s14 = sld [smem:[#allocation2]]
  %v15 = vstv %s14
  %v16 = vmul.f32 %v12, %v15
  %v17 = vmul.f32 %v13, %v15
  %v18 = vmax.f32 %v16, %v17
  %19 = vmax.xlane.f32.xlu0 %v18
  %v20 = vpop.xlane.xlu0 %19
  %v21 = vsub.f32 %v16, %v20
  %v22 = vsub.f32 %v17, %v20
  %v23 = vmul.f32 %v21, 1.442695
  %v24 = vpow.pop %v23
  %v25 = vmul.f32 %v22, 1.442695
  %v26 = vpow.pop %v25
  %v27 = vadd.f32 %v24, %v26
  %28 = vadd.xlane.f32.xlu0 %v27
  %v29 = vpop.xlane.xlu0 %28
  %v30 = vrcp.pop %v29
  %v31 = vmul.f32 %v24, %v30
  %v32 = vmul.f32 %v26, %v30
  %v33 = vmul.f32 %v31, %v12
  %v34 = vmul.f32 %v32, %v13
  %35 = vst [vmem:[%s2] sm:$0xff] %v33
  %36 = vst [vmem:[%s2 + $0x8] sm:$0xff] %v34
  // Predicated region
  $region10: #{_fovea_impl.1} parent=0 // pred_check
    _
  $region11: #{_fovea_impl.1} parent=0 // pred_check_branch
    %38 = sbr.rel (0) target = $region13
  $region12: #{_fovea_impl.1} parent=0 // pred_region
    _
  $region13: #{_fovea_impl.1} parent=0 // pred_fallthru
    _
  // Predicated region
  $region14: #{_fovea_impl.1} parent=0 // pred_check
    _
  $region15: #{_fovea_impl.1} parent=0 // pred_check_branch
    %40 = sbr.rel (0) target = $region17
  $region16: #{_fovea_impl.1} parent=0 // pred_region
    _
  $region17: #{_fovea_impl.1} parent=0 // pred_fallthru
    _

</llo_original>
